<compile_context>
chip_gen: v7x
topology: tpu7x:2x2x1
jax: 0.10.0
libtpu: 0.0.40
codegen_flags: <defaults>
</compile_context>

<pallas_src>
import functools
import math

import jax
import jax.numpy as jnp
import numpy as np
from jax.experimental import pallas as pl
from jax.experimental.pallas import tpu as pltpu


def _get_num_frequencies_nyquist(samples):
    nyquist_rate = 1.0 / (2.0 * (2.0 * 1.0 / samples))
    return int(math.floor(math.log(nyquist_rate, 2)))


def _vmem_budgets():
    """Generation-aware (per-step block budget, scoped VMEM limit) in bytes."""
    try:
        cap = int(pltpu.get_tpu_info().vmem_capacity_bytes)
    except Exception:
        cap = 64 * 1024 * 1024  # conservative fallback: v7x has 64 MiB per TC
    cap = max(cap, 32 * 1024 * 1024)
    vmem_limit = min((cap * 3) // 4, 112 * 1024 * 1024)
    block_budget = cap // 2
    return block_budget, vmem_limit


def _pick_tiles(B, C, out_dim, hw, itemsize, budget):
    """Pick (batch tile, lane tile). No divisibility constraints (ragged last blocks
    are handled by cdiv grids); channel dims are rounded up to the sublane packing so
    the VMEM footprint estimate is realistic on all generations."""
    sub = 8 * max(1, 4 // itemsize)          # f32 -> 8 sublanes, bf16 -> 16, int8 -> 32
    c_in = -(-C // sub) * sub
    c_pe = -(-out_dim // sub) * sub
    c_cat = -(-(C + out_dim) // sub) * sub

    def step_bytes(bt, t):
        # double-buffered x block + pe block + out block
        return 2 * t * (bt * c_in + c_pe + bt * c_cat) * itemsize

    if hw <= 128:
        tile_hw = hw                         # full-extent lane dim (un-tiled)
    else:
        # Largest multiple of 128 that fits the budget; capped at 8192 lanes and
        # capped so the parallel hw axis has extent >= 2 (v7x has 2 TensorCores).
        max_t = min(8192, ((hw - 1) // 128) * 128)
        tile_hw = 128
        for t in range(max_t, 127, -128):
            if step_bytes(1, t) <= budget:
                tile_hw = t
                break

    tile_b = 1
    for bt in range(min(B, 64), 0, -1):
        if step_bytes(bt, tile_hw) <= budget:
            tile_b = bt
            break

    return tile_b, tile_hw


def _concat_kernel(x_ref, pe_ref, o_ref, *, n_in):
    """Write x and the (batch-invariant) positional encoding into channel slices.

    x_ref:  (Bt, C, T)
    pe_ref: (out_dim, T)
    o_ref:  (Bt, C + out_dim, T)
    """
    # Input features -> channels [0, C)
    o_ref[:, :n_in, :] = x_ref[...].astype(o_ref.dtype)
    # Positional encoding -> channels [C, C + out_dim), broadcast over the batch tile.
    pe = pe_ref[...].astype(o_ref.dtype)
    bt = o_ref.shape[0]
    o_ref[:, n_in:, :] = jnp.broadcast_to(pe[None], (bt,) + pe.shape)


class PosEncodingNeRFPallas:
    """JAX/Pallas equivalent of PosEncodingNeRF for in_features == 2 (NCHW input)."""

    def __init__(self, in_features, sidelength, fn_samples=None, use_nyquist=True):
        assert in_features == 2, "kernel implemented for the 2-D (image) case"
        self.in_features = in_features
        if isinstance(sidelength, int):
            sidelength = (sidelength, sidelength)
        self.sidelength = tuple(sidelength)
        assert self.sidelength[0] > 1 and self.sidelength[1] > 1, (
            "sidelength must be > 1 per axis (torch's (N-1) normalization)")

        self.num_frequencies = 4
        if use_nyquist:
            self.num_frequencies = _get_num_frequencies_nyquist(
                min(self.sidelength[0], self.sidelength[1])
            )
        self.out_dim = in_features + 2 * in_features * self.num_frequencies

        # --- Batch-invariant PE buffer, built once (vectorized), matching torch's
        # --- register_buffer('pos_enc', ...).  Channel order:
        # [x, y, sin(f0*x), cos(f0*x), sin(f0*y), cos(f0*y), sin(f1*x), ...]
        H, W = self.sidelength
        hh = (np.arange(H, dtype=np.float32) / np.float32(H - 1) - 0.5) * 2.0
        ww = (np.arange(W, dtype=np.float32) / np.float32(W - 1) - 0.5) * 2.0
        cx = np.broadcast_to(hh[:, None], (H, W)).reshape(-1)      # row coord, row-major
        cy = np.broadcast_to(ww[None, :], (H, W)).reshape(-1)      # col coord
        coords = np.stack([cx, cy], axis=0).astype(np.float32)     # (2, H*W)

        nf = self.num_frequencies
        scales = (2.0 ** np.arange(nf, dtype=np.float32)) * np.float32(np.pi)
        args = scales[:, None, None] * coords[None, :, :]          # (F, 2, HW)
        sin_cos = np.stack([np.sin(args), np.cos(args)], axis=2)   # (F, 2, 2, HW)
        pe = np.concatenate(
            [coords, sin_cos.reshape(nf * in_features * 2, -1)], axis=0
        )                                                          # (out_dim, HW)
        self._pe_np = pe.astype(np.float32)
        self._pe_cache = {}                                        # dtype -> device array

    def _pe_for_dtype(self, dtype):
        dt = jnp.dtype(dtype)
        pe = self._pe_cache.get(dt)
        if pe is None:
            pe = jnp.asarray(self._pe_np, dtype=dt)
            self._pe_cache[dt] = pe
        return pe

    def __call__(self, x):
        B, C, H, W = x.shape
        assert (H, W) == self.sidelength
        hw = H * W
        c_out = C + self.out_dim

        x_flat = x.reshape(B, C, hw)          # metadata-only reshape (contiguous)
        pe = self._pe_for_dtype(x.dtype)      # cached per-dtype, no per-call convert

        itemsize = jnp.dtype(x.dtype).itemsize
        budget, vmem_limit = _vmem_budgets()
        tile_b, tile_hw = _pick_tiles(B, C, self.out_dim, hw, itemsize, budget)

        # hw axis outermost (parallel, split across TensorCores); batch axis innermost
        # (arbitrary) so the batch-invariant PE block is fetched once per hw tile.
        grid = (pl.cdiv(hw, tile_hw), pl.cdiv(B, tile_b))

        kernel = functools.partial(_concat_kernel, n_in=C)
        bytes_accessed = int((x_flat.size + pe.size + B * c_out * hw) * itemsize)

        out_flat = pl.pallas_call(
            kernel,
            out_shape=jax.ShapeDtypeStruct((B, c_out, hw), x.dtype),
            grid=grid,
            in_specs=[
                pl.BlockSpec((tile_b, C, tile_hw), lambda t, b: (b, 0, t)),
                pl.BlockSpec((self.out_dim, tile_hw), lambda t, b: (0, t)),
            ],
            out_specs=pl.BlockSpec((tile_b, c_out, tile_hw), lambda t, b: (b, 0, t)),
            compiler_params=pltpu.CompilerParams(
                dimension_semantics=("parallel", "arbitrary"),
                vmem_limit_bytes=vmem_limit,
            ),
            cost_estimate=pl.CostEstimate(
                flops=0, transcendentals=0, bytes_accessed=bytes_accessed
            ),
        )(x_flat, pe)

        return out_flat.reshape(B, c_out, H, W)


def _reference_forward(x_np, sidelength, num_frequencies, in_features):
    """Independent numpy replica of the PyTorch forward (for correctness check)."""
    H, W = sidelength
    pc = np.stack(np.mgrid[:H, :W], axis=-1).astype(np.float32)   # (H, W, 2)
    pc[..., 0] /= (H - 1)
    pc[..., 1] /= (W - 1)
    pc = (pc - 0.5) * 2.0
    coords = pc.reshape(-1, in_features)                          # (N, 2)
    pe = coords
    for i in range(num_frequencies):
        for j in range(in_features):
            c = coords[:, j]
            s = np.sin(2 ** i * np.pi * c)[:, None]
            co = np.cos(2 ** i * np.pi * c)[:, None]
            pe = np.concatenate([pe, s, co], axis=1)
    pe = pe.T.reshape(1, -1, H, W)                                # (1, out_dim, H, W)
    pe = np.broadcast_to(pe, (x_np.shape[0],) + pe.shape[1:]).astype(x_np.dtype)
    return np.concatenate([x_np, pe], axis=1)


if __name__ == "__main__":
    key = jax.random.PRNGKey(0)
    B, C, H, W = 2, 4, 16, 16
    x = jax.random.normal(key, (B, C, H, W), dtype=jnp.float32)

    mod = PosEncodingNeRFPallas(in_features=2, sidelength=(H, W), use_nyquist=True)
    out = mod(x)
    out = jax.block_until_ready(out)

    # For 16x16 the nyquist rule gives 2 frequencies -> out_dim = 2 + 2*2*2 = 10.
    assert out.shape == (B, C + mod.out_dim, H, W), out.shape

    ref = _reference_forward(
        np.asarray(x), mod.sidelength, mod.num_frequencies, mod.in_features
    )
    np.testing.assert_allclose(np.asarray(out), ref, rtol=1e-5, atol=1e-5)

    print("KERNEL_OK")
</pallas_src>

<mosaic_0001>
module attributes {stable_mosaic.version = 11 : i64} {
  func.func @_concat_kernel(%arg0: i32, %arg1: i32, %arg2: memref<2x4x128xf32, #tpu.memory_space<vmem>>, %arg3: memref<10x128xf32, #tpu.memory_space<vmem>>, %arg4: memref<2x14x128xf32, #tpu.memory_space<vmem>>) attributes {dimension_semantics = [#tpu.dimension_semantics<parallel>, #tpu.dimension_semantics<arbitrary>], iteration_bounds = array<i64: 2, 1>, scalar_prefetch = 0 : i64, scratch_operands = 0 : i64, tpu.core_type = #tpu.core_type<tc>, window_params = [{transform_indices = @transform_0, window_bounds = array<i64: 2, 4, 128>}, {transform_indices = @transform_1, window_bounds = array<i64: 10, 128>}, {transform_indices = @transform_2, window_bounds = array<i64: 2, 14, 128>}]} {
    %c0 = arith.constant 0 : index
    %c0_0 = arith.constant 0 : index
    %c0_1 = arith.constant 0 : index
    %0 = vector.load %arg2[%c0, %c0_0, %c0_1] : memref<2x4x128xf32, #tpu.memory_space<vmem>>, vector<2x4x128xf32>
    %c0_2 = arith.constant 0 : index
    %c0_3 = arith.constant 0 : index
    %c0_4 = arith.constant 0 : index
    %1 = vector.load %arg4[%c0_2, %c0_3, %c0_4] : memref<2x14x128xf32, #tpu.memory_space<vmem>>, vector<2x4x128xf32>
    tpu.vector_store %arg4[%c0_2, %c0_3, %c0_4], %0 {strides = array<i32>} : memref<2x14x128xf32, #tpu.memory_space<vmem>>, vector<2x4x128xf32>,
    %c0_5 = arith.constant 0 : index
    %c0_6 = arith.constant 0 : index
    %2 = vector.load %arg3[%c0_5, %c0_6] : memref<10x128xf32, #tpu.memory_space<vmem>>, vector<10x128xf32>
    %3 = vector.shape_cast %2 : vector<10x128xf32> to vector<1x10x128xf32>
    %4 = vector.shape_cast %3 : vector<1x10x128xf32> to vector<1x10x128xf32>
    %5 = vector.broadcast %4 : vector<1x10x128xf32> to vector<2x10x128xf32>
    %c0_7 = arith.constant 0 : index
    %c4 = arith.constant 4 : index
    %c0_8 = arith.constant 0 : index
    %6 = vector.load %arg4[%c0_7, %c4, %c0_8] : memref<2x14x128xf32, #tpu.memory_space<vmem>>, vector<2x10x128xf32>
    tpu.vector_store %arg4[%c0_7, %c4, %c0_8], %5 {strides = array<i32>} : memref<2x14x128xf32, #tpu.memory_space<vmem>>, vector<2x10x128xf32>,
    return
  }
  func.func @transform_0(%arg0: i32, %arg1: i32) -> (i32, i32, i32) {
    %c0_i32 = arith.constant 0 : i32
    %c0_i32_0 = arith.constant 0 : i32
    return %arg1, %c0_i32, %arg0 : i32, i32, i32
  }
  func.func @transform_1(%arg0: i32, %arg1: i32) -> (i32, i32) {
    %c0_i32 = arith.constant 0 : i32
    %c0_i32_0 = arith.constant 0 : i32
    return %c0_i32, %arg0 : i32, i32
  }
  func.func @transform_2(%arg0: i32, %arg1: i32) -> (i32, i32, i32) {
    %c0_i32 = arith.constant 0 : i32
    %c0_i32_0 = arith.constant 0 : i32
    return %arg1, %c0_i32, %arg0 : i32, i32, i32
  }
}

</mosaic_0001>

<llo_original>
// kernel: tpu_custom_call.1
$region0: #{tpu_custom_call.1}
  #allocation0 [shape = 'u32[]', space=smem, size = 0x4, offset = 0x4, fixed_abs, tag = 'smem constant byte address 0x4 - core index']
  #allocation1 [shape = 'u32[144,128]{1,0:T(1,128)}', space=vmem, size = 0x12000, scoped, tag = 'internal scratch']
  %s0 = inlined_call_operand.hbm [shape: f32[2,4,256], index: 0, kind: input, shape index: {}]
  %s1 = inlined_call_operand.hbm [shape: f32[10,256], index: 1, kind: input, shape index: {}]
  %s2 = inlined_call_operand.vmem [shape: f32[2,14,256], index: 2, kind: output, shape index: {}]
  %s3 = sld [smem:[#allocation0]]
  $region83: #{tpu_custom_call.1} parent=0
    _
  %s5 = ssub.s32 1, %s3
  %s6 = scalar_select 0, %s5, %s3
  $region1: #{tpu_custom_call.1} parent=0
    #allocation2 [shape = 'u8[8192]{0}', space=vmem, size = 0x2000, scoped, tag = 'input window, operand 0']
    #allocation3 [shape = 's32[2]{0}', space=sflag, size = 0x8, scoped, tag = 'scoped memory for tpu_custom_call.1']
    #allocation4 [shape = 'u8[16384]{0}', space=vmem, size = 0x4000, scoped, tag = 'input window, operand 1']
    #allocation5 [shape = 's32[2]{0}', space=sflag, size = 0x8, scoped, tag = 'scoped memory for tpu_custom_call.1']
    #allocation6 [shape = 'u8[32768]{0}', space=vmem, size = 0x8000, scoped, tag = 'output window, operand 0']
    %7 = vsyncpa [#allocation3], 0
    %s8 = scalar_lea.sflag [#allocation3], 1
    %9 = vsyncpa %s8, 0
    %10 = vsyncpa [#allocation5], 0
    %s11 = scalar_lea.sflag [#allocation5], 1
    %12 = vsyncpa %s11, 0
    loop: start=0, step=1, limit=4
    $region2: #{tpu_custom_call.1} parent=1 // loop_pre_header
      _
    $region3: #{tpu_custom_call.1} parent=1 // loop_header
      %s14 = sphi 0, %s18
      %p15 = scmp.ge.s32.totalorder %s14, 4
      %s21 = sphi 0, %s33
      %s22 = sphi 0, %s29
      %s23 = sphi 0, %s21
      %s24 = sphi 0, %s22
      %s25 = sphi 0, %s23
      %s26 = sphi 0, %s24
      %s38 = sphi 0, %s40
      %s41 = sphi 0, %s38
      %s42 = sphi 0, %s41
      %s58 = sphi 0, %s42
      %s64 = sphi 0, %s66
      %s67 = sphi 0, %s64
      %s68 = sphi 0, %s67
      %s84 = sphi 0, %s68
      %s92 = sphi 0, %s94
      %s95 = sphi 0, %s92
      %s96 = sphi 0, %s95
      %s112 = sphi 0, %s96
    $region4: #{tpu_custom_call.1} parent=1 // loop_header_branch
      %17 = sbr.rel (%p15) target = $region8
    $region5: #{tpu_custom_call.1} parent=1 // loop_body
      %s19 = ssub.s32 %s14, 1
      %s20 = ssub.s32 %s14, 2
      %s27 = sadd.s32 1, %s22
      %p28 = scmp.ge.s32.totalorder %s27, 1
      %s29 = scalar_select %p28, 0, %s27
      %s30 = sadd.s32 1, %s21
      %s31 = scalar_select %p28, %s30, %s21
      %p32 = scmp.ge.s32.totalorder %s31, 2
      %s33 = scalar_select %p32, 0, %s31
      %s34 = ssub.s32 %s22, %s29
      %s35 = ssub.s32 %s21, %s33
      %s36 = sor.u32 %s34, %s35
      %p37 = scmp.eq.s32.totalorder %s36, 0
      %s39 = sadd.s32 %s38, 1
      %s40 = scalar_select %p37, %s38, %s39
      %p43 = pneg %p37
      %p44 = scmp.eq.s32.totalorder %s14, 1
      %p45 = por %p43, %p44
      %p46 = scmp.ne.s32.totalorder %s38, %s41
      %p47 = scmp.eq.s32.totalorder %s14, 0
      %p48 = por %p46, %p47
      %p49 = scmp.ne.s32.totalorder %s38, %s41
      %p50 = scmp.eq.s32.totalorder %s19, 1
      %p51 = por %p49, %p50
      %p52 = scmp.ne.s32.totalorder %s41, %s42
      %p53 = scmp.eq.s32.totalorder %s19, 0
      %p54 = por %p52, %p53
      %p55 = scmp.ne.s32.totalorder %s41, %s42
      %p56 = scmp.eq.s32.totalorder %s20, 1
      %p57 = por %p55, %p56
      %p59 = scmp.ne.s32.totalorder %s42, %s58
      %p60 = scmp.eq.s32.totalorder %s20, 0
      %p61 = por %p59, %p60
      %s62 = ssub.s32 %s21, %s33
      %p63 = scmp.eq.s32.totalorder %s62, 0
      %s65 = sadd.s32 %s64, 1
      %s66 = scalar_select %p63, %s64, %s65
      %p69 = pneg %p63
      %p70 = scmp.eq.s32.totalorder %s14, 1
      %p71 = por %p69, %p70
      %p72 = scmp.ne.s32.totalorder %s64, %s67
      %p73 = scmp.eq.s32.totalorder %s14, 0
      %p74 = por %p72, %p73
      %p75 = scmp.ne.s32.totalorder %s64, %s67
      %p76 = scmp.eq.s32.totalorder %s19, 1
      %p77 = por %p75, %p76
      %p78 = scmp.ne.s32.totalorder %s67, %s68
      %p79 = scmp.eq.s32.totalorder %s19, 0
      %p80 = por %p78, %p79
      %p81 = scmp.ne.s32.totalorder %s67, %s68
      %p82 = scmp.eq.s32.totalorder %s20, 1
      %p83 = por %p81, %p82
      %p85 = scmp.ne.s32.totalorder %s68, %s84
      %p86 = scmp.eq.s32.totalorder %s20, 0
      %p87 = por %p85, %p86
      %s88 = ssub.s32 %s22, %s29
      %s89 = ssub.s32 %s21, %s33
      %s90 = sor.u32 %s88, %s89
      %p91 = scmp.eq.s32.totalorder %s90, 0
      %s93 = sadd.s32 %s92, 1
      %s94 = scalar_select %p91, %s92, %s93
      %p97 = pneg %p91
      %p98 = scmp.eq.s32.totalorder %s14, 1
      %p99 = por %p97, %p98
      %p100 = scmp.ne.s32.totalorder %s92, %s95
      %p101 = scmp.eq.s32.totalorder %s14, 0
      %p102 = por %p100, %p101
      %p103 = scmp.ne.s32.totalorder %s92, %s95
      %p104 = scmp.eq.s32.totalorder %s19, 1
      %p105 = por %p103, %p104
      %p106 = scmp.ne.s32.totalorder %s95, %s96
      %p107 = scmp.eq.s32.totalorder %s19, 0
      %p108 = por %p106, %p107
      %p109 = scmp.ne.s32.totalorder %s95, %s96
      %p110 = scmp.eq.s32.totalorder %s20, 1
      %p111 = por %p109, %p110
      %p113 = scmp.ne.s32.totalorder %s96, %s112
      %p114 = scmp.eq.s32.totalorder %s20, 0
      %p115 = por %p113, %p114
      %p116 = scmp.le.s32.totalorder 1, %s14
      %p117 = scmp.lt.s32.totalorder %s14, 3
      %p118 = pnand %p116, %p117
      %p119 = pneg %p118
      // Predicated region
      $region9: #{tpu_custom_call.1} parent=5 // pred_check
        _
      $region10: #{tpu_custom_call.1} parent=5 // pred_check_branch
        %121 = sbr.rel (%p118) target = $region12
      $region11: #{tpu_custom_call.1} parent=5 // pred_region
        %s122 = ssub.s32 %s14, 1
      $region12: #{tpu_custom_call.1} parent=5 // pred_fallthru
        _
      %p123 = scmp.lt.s32.totalorder %s14, 2
      // Predicated region
      $region13: #{tpu_custom_call.1} parent=5 // pred_check
        %p124 = pneg %p123
      $region14: #{tpu_custom_call.1} parent=5 // pred_check_branch
        %126 = sbr.rel (%p124) target = $region16
      $region15: #{tpu_custom_call.1} parent=5 // pred_region
        // Predicated region
        $region17: #{tpu_custom_call.1} parent=15 // pred_check
          %p127 = pneg %p48
        $region18: #{tpu_custom_call.1} parent=15 // pred_check_branch
          %129 = sbr.rel (%p127) target = $region20
        $region19: #{tpu_custom_call.1} parent=15 // pred_region
          %s130 = sand.u32 %s38, 1
          %s131 = scalar_lea.sflag [#allocation3], %s130
          %s132 = sand.u32 %s38, 1
          %s133 = smul.addr %s132, 8
          %s134 = scalar_lea.vmem [#allocation2], %s133
          %s135 = smul.u32 2, %s22
          %s137 = ssub.s32 128, 128
          %138 = vsyncadd %s131, %s137
          %s139 = smul.addr %s135, 2
          %s140 = sadd.s32 %s21, %s139
          %s141 = smul.addr %s140, 64
          %s142 = scalar_lea.hbm %s0, %s141
          %s143 = sshll.u32 %s134, 4
          %s144 = int_to_ptr.vmem [resolvable:$true] %s143
          %149 = dma.hbm_to_vmem [thread:$0]  %s142, 128, %s144, %s131, 128, 64, 4
        $region20: #{tpu_custom_call.1} parent=15 // pred_fallthru
          _
        // Predicated region
        $region21: #{tpu_custom_call.1} parent=15 // pred_check
          %p150 = pneg %p74
        $region22: #{tpu_custom_call.1} parent=15 // pred_check_branch
          %152 = sbr.rel (%p150) target = $region24
        $region23: #{tpu_custom_call.1} parent=15 // pred_region
          %s153 = sand.u32 %s64, 1
          %s154 = scalar_lea.sflag [#allocation5], %s153
          %s155 = sand.u32 %s64, 1
          %s156 = smul.addr %s155, 16
          %s157 = scalar_lea.vmem [#allocation4], %s156
          %s159 = ssub.s32 256, 256
          %160 = vsyncadd %s154, %s159
          %s161 = smul.addr %s21, 128
          %s162 = scalar_lea.hbm %s1, %s161
          %s163 = sshll.u32 %s157, 4
          %s164 = int_to_ptr.vmem [resolvable:$true] %s163
          %169 = dma.hbm_to_vmem [thread:$0]  %s162, 256, %s164, %s154, 256, 128, 8
        $region24: #{tpu_custom_call.1} parent=15 // pred_fallthru
          _
      $region16: #{tpu_custom_call.1} parent=5 // pred_fallthru
        _
      %p170 = scmp.le.s32.totalorder 1, %s14
      %p171 = scmp.lt.s32.totalorder %s14, 3
      %p172 = pnand %p170, %p171
      %p173 = pneg %p172
      // Predicated region
      $region25: #{tpu_custom_call.1} parent=5 // pred_check
        _
      $region26: #{tpu_custom_call.1} parent=5 // pred_check_branch
        %175 = sbr.rel (%p172) target = $region28
      $region27: #{tpu_custom_call.1} parent=5 // pred_region
        %s176 = ssub.s32 %s14, 1
        %s177 = sand.u32 %s41, 1
        %s178 = scalar_lea.sflag [#allocation3], %s177
        %s179 = sand.u32 %s41, 1
        %s180 = smul.addr %s179, 8
        %s181 = scalar_lea.vmem [#allocation2], %s180
        // Predicated region
        $region29: #{tpu_custom_call.1} parent=27 // pred_check
          %p182 = pneg %p54
        $region30: #{tpu_custom_call.1} parent=27 // pred_check_branch
          %184 = sbr.rel (%p182) target = $region32
        $region31: #{tpu_custom_call.1} parent=27 // pred_region
          %185 = dma.done %s178, 128
        $region32: #{tpu_custom_call.1} parent=27 // pred_fallthru
          _
        %s186 = sand.u32 %s67, 1
        %s187 = scalar_lea.sflag [#allocation5], %s186
        %s188 = sand.u32 %s67, 1
        %s189 = smul.addr %s188, 16
        %s190 = scalar_lea.vmem [#allocation4], %s189
        // Predicated region
        $region33: #{tpu_custom_call.1} parent=27 // pred_check
          %p191 = pneg %p80
        $region34: #{tpu_custom_call.1} parent=27 // pred_check_branch
          %193 = sbr.rel (%p191) target = $region36
        $region35: #{tpu_custom_call.1} parent=27 // pred_region
          %194 = dma.done %s187, 256
        $region36: #{tpu_custom_call.1} parent=27 // pred_fallthru
          _
        %s195 = sand.u32 %s41, 1
        %s196 = scalar_lea.sflag [#allocation3], %s195
        %s197 = sand.u32 %s41, 1
        %s198 = smul.addr %s197, 8
        %s199 = scalar_lea.vmem [#allocation2], %s198
        %p200 = pneg %p54
        %p201 = pneg %p51
        %s202 = sand.u32 %s67, 1
        %s203 = scalar_lea.sflag [#allocation5], %s202
        %s204 = sand.u32 %s67, 1
        %s205 = smul.addr %s204, 16
        %s206 = scalar_lea.vmem [#allocation4], %s205
        %p207 = pneg %p80
        %p208 = pneg %p77
        %p209 = pneg %p108
        %p210 = pneg %p105
        %s211 = sand.u32 %s95, 1
        %s212 = sand.u32 %s95, 1
        %s213 = smul.addr %s212, 32
        %s214 = scalar_lea.vmem [#allocation6], %s213
        %s215 = smul.u32 2, %s24
        %s216 = smul.u32 2, %s24
        %v217 = vld [vmem:[%s181] sm:$0xf]
        %v218 = vld [vmem:[%s181 + $0x4] sm:$0xf]
        %219 = vst [vmem:[%s214] sm:$0xf] %v217
        %220 = vst [vmem:[%s214 + $0x10] sm:$0xf] %v218
        %v221 = vld [vmem:[%s190] sm:$0xff]
        %v222 = vld [vmem:[%s190 + $0x8] sm:$0x3]
        %223 = vst [vmem:[%s214 + $0x4] sm:$0xff] %v221
        %224 = vst [vmem:[%s214 + $0xc] sm:$0x3] %v222
        %225 = vst [vmem:[%s214 + $0x14] sm:$0xff] %v221
        %226 = vst [vmem:[%s214 + $0x1c] sm:$0x3] %v222
        %s227 = sand.u32 %s95, 1
        %s228 = sand.u32 %s95, 1
        %s229 = smul.addr %s228, 32
        %s230 = scalar_lea.vmem [#allocation6], %s229
        // Predicated region
        $region37: #{tpu_custom_call.1} parent=27 // pred_check
          %p231 = pneg %p105
        $region38: #{tpu_custom_call.1} parent=27 // pred_check_branch
          %233 = sbr.rel (%p231) target = $region40
        $region39: #{tpu_custom_call.1} parent=27 // pred_region
          %s234 = smul.u32 2, %s24
          %s235 = smul.addr %s234, 4
          %s236 = sadd.s32 %s23, %s235
          %s237 = smul.addr %s236, 8
          %s238 = scalar_lea.vmem %s2, %s237
          // Predicated region
          $region41: #{tpu_custom_call.1} parent=39 // pred_check
            _
          $region42: #{tpu_custom_call.1} parent=39 // pred_check_branch
            %240 = sbr.rel (0) target = $region44
          $region43: #{tpu_custom_call.1} parent=39 // pred_region
            // Predicated region
            $region45: #{tpu_custom_call.1} parent=43 // pred_check
              _
            $region46: #{tpu_custom_call.1} parent=43 // pred_check_branch
              %242 = sbr.rel (0) target = $region48
            $region47: #{tpu_custom_call.1} parent=43 // pred_region
              // Predicated region
              $region60: #{tpu_custom_call.1} parent=47 // pred_check
                _
              $region61: #{tpu_custom_call.1} parent=47 // pred_check_branch
                %263 = sbr.rel (0) target = $region63
              $region62: #{tpu_custom_call.1} parent=47 // pred_region
                loop: start=0, step=1, limit=1
                $region64: #{tpu_custom_call.1} parent=62 // loop_pre_header
                  _
                $region65: #{tpu_custom_call.1} parent=62 // loop_header
                  %s265 = sphi 0, %s269
                  %p266 = scmp.ge.s32.totalorder %s265, 1
                  %s270 = sphi %s230, %s230
                  %s271 = sphi %s238, %s238
                $region66: #{tpu_custom_call.1} parent=62 // loop_header_branch
                  %268 = sbr.rel (%p266) target = $region70
                $region67: #{tpu_custom_call.1} parent=62 // loop_body
                  %v272 = vld [vmem:[%s270] sm:$0xff]
                  %273 = vst [vmem:[%s271] sm:$0xff] %v272
                  %v274 = vld [vmem:[%s270 + $0x8] sm:$0xff]
                  %275 = vst [vmem:[%s271 + $0x10] sm:$0xff] %v274
                  %v276 = vld [vmem:[%s270 + $0x10] sm:$0xff]
                  %277 = vst [vmem:[%s271 + $0x20] sm:$0xff] %v276
                  %v278 = vld [vmem:[%s270 + $0x18] sm:$0xff]
                  %279 = vst [vmem:[%s271 + $0x30] sm:$0xff] %v278
                $region68: #{tpu_custom_call.1} parent=62 // loop_footer
                  %s269 = sadd.s32 1, %s265
                $region69: #{tpu_custom_call.1} parent=62 // loop_footer_branch
                  %264 = sbr.rel target = $region65
                $region70: #{tpu_custom_call.1} parent=62 // loop_exit
                  _
              $region63: #{tpu_custom_call.1} parent=47 // pred_fallthru
                _
              // Predicated region
              $region71: #{tpu_custom_call.1} parent=47 // pred_check
                _
              $region72: #{tpu_custom_call.1} parent=47 // pred_check_branch
                %281 = sbr.rel target = $region74
              $region73: #{tpu_custom_call.1} parent=47 // pred_region
                _
              $region74: #{tpu_custom_call.1} parent=47 // pred_fallthru
                _
            $region48: #{tpu_custom_call.1} parent=43 // pred_fallthru
              _
            // Predicated region
            $region49: #{tpu_custom_call.1} parent=43 // pred_check
              _
            $region50: #{tpu_custom_call.1} parent=43 // pred_check_branch
              %244 = sbr.rel target = $region52
            $region51: #{tpu_custom_call.1} parent=43 // pred_region
              loop: start=0, step=1, limit=1
              $region53: #{tpu_custom_call.1} parent=51 // loop_pre_header
                _
              $region54: #{tpu_custom_call.1} parent=51 // loop_header
                %s247 = sphi 0, %s251
                %p248 = scmp.ge.s32.totalorder %s247, 1
                %s252 = sphi %s230, %s230
                %s253 = sphi %s238, %s238
              $region55: #{tpu_custom_call.1} parent=51 // loop_header_branch
                %250 = sbr.rel (%p248) target = $region59
              $region56: #{tpu_custom_call.1} parent=51 // loop_body
                %v254 = vld [vmem:[%s252] sm:$0xff]
                %255 = vst [vmem:[%s253] sm:$0xff] %v254
                %v256 = vld [vmem:[%s252 + $0x8] sm:$0xff]
                %257 = vst [vmem:[%s253 + $0x10] sm:$0xff] %v256
                %v258 = vld [vmem:[%s252 + $0x10] sm:$0xff]
                %259 = vst [vmem:[%s253 + $0x20] sm:$0xff] %v258
                %v260 = vld [vmem:[%s252 + $0x18] sm:$0xff]
                %261 = vst [vmem:[%s253 + $0x30] sm:$0xff] %v260
              $region57: #{tpu_custom_call.1} parent=51 // loop_footer
                %s251 = sadd.s32 1, %s247
              $region58: #{tpu_custom_call.1} parent=51 // loop_footer_branch
                %246 = sbr.rel target = $region54
              $region59: #{tpu_custom_call.1} parent=51 // loop_exit
                _
            $region52: #{tpu_custom_call.1} parent=43 // pred_fallthru
              _
          $region44: #{tpu_custom_call.1} parent=39 // pred_fallthru
            _
          %282 = vnop
        $region40: #{tpu_custom_call.1} parent=27 // pred_fallthru
          _
      $region28: #{tpu_custom_call.1} parent=5 // pred_fallthru
        _
      %p283 = scmp.le.s32.totalorder 2, %s14
      // Predicated region
      $region75: #{tpu_custom_call.1} parent=5 // pred_check
        %p284 = pneg %p283
      $region76: #{tpu_custom_call.1} parent=5 // pred_check_branch
        %286 = sbr.rel (%p284) target = $region78
      $region77: #{tpu_custom_call.1} parent=5 // pred_region
        %s287 = ssub.s32 %s14, 2
        // Predicated region
        $region79: #{tpu_custom_call.1} parent=77 // pred_check
          %p288 = pneg %p111
        $region80: #{tpu_custom_call.1} parent=77 // pred_check_branch
          %290 = sbr.rel (%p288) target = $region82
        $region81: #{tpu_custom_call.1} parent=77 // pred_region
          %s291 = sand.u32 %s96, 1
          %s292 = sand.u32 %s96, 1
          %s293 = smul.addr %s292, 32
          %s294 = scalar_lea.vmem [#allocation6], %s293
        $region82: #{tpu_custom_call.1} parent=77 // pred_fallthru
          _
      $region78: #{tpu_custom_call.1} parent=5 // pred_fallthru
        _
    $region6: #{tpu_custom_call.1} parent=1 // loop_footer
      %s18 = sadd.s32 1, %s14
    $region7: #{tpu_custom_call.1} parent=1 // loop_footer_branch
      %13 = sbr.rel target = $region3
    $region8: #{tpu_custom_call.1} parent=1 // loop_exit
      _
    %295 = vsyncpa [#allocation3], 1
    %s296 = scalar_lea.sflag [#allocation3], 1
    %297 = vsyncpa %s296, 1
    %298 = vsyncpa [#allocation5], 1
    %s299 = scalar_lea.sflag [#allocation5], 1
    %300 = vsyncpa %s299, 1

</llo_original>
